<compile_context>
chip_gen: v7x
topology: tpu7x:2x2x1
jax: 0.10.0
libtpu: 0.0.40
codegen_flags: <defaults>
</compile_context>

<pallas_src>
import functools
import math

import jax
import jax.numpy as jnp
from jax.experimental import pallas as pl
from jax.experimental.pallas import tpu as pltpu


def _degree_encoder_kernel(deg_ref, w_ref, b_ref, out_ref, *, packed: bool):
    w = w_ref[...]
    b = b_ref[...]
    if packed:
        # deg_ref: (TR, P); w: (P, P*E) block-diagonal.  Small-K matmul that
        # lands directly in the lane-dense packed output layout.  Its cost is
        # hidden under the HBM write stream on all generations (v7x incl.).
        y = jnp.dot(deg_ref[...], w, preferred_element_type=jnp.float32)
    else:
        # deg_ref: (TR, 1); w: (1, E).  Outer product as a VPU broadcast —
        # no K=1 MXU matmul.
        y = deg_ref[...] * w
    out_ref[...] = jnp.maximum(y + b, 0.0).astype(out_ref.dtype)


def _round_up(x: int, m: int) -> int:
    return ((x + m - 1) // m) * m


def _pick_row_tile(packed_n: int, per_row_bytes: int, *,
                   row_tile_target: int, vmem_budget_bytes: int) -> int:
    """Row tile (in packed rows).  Multiple of 16 (legal for f32 and bf16
    outputs) or the full array; sized from a VMEM budget; capped so the grid
    has >= 4 steps when possible (v7x megacore + pipelining)."""
    if packed_n <= 256 and packed_n * per_row_bytes <= vmem_budget_bytes:
        return packed_n                       # single full-array block (legal)
    budget_rows = (vmem_budget_bytes // per_row_bytes) // 16 * 16
    quarter = _round_up(pl.cdiv(packed_n, 4), 16)   # aim for >= 4 grid steps
    rt = max(16, min(budget_rows, row_tile_target, quarter))
    return min(rt, packed_n)


def degree_encoder(degrees: jax.Array, weight: jax.Array, bias: jax.Array, *,
                   out_dtype=None,
                   row_tile_target: int = 8192,
                   vmem_budget_bytes: int = 12 << 20,
                   max_packed_lane: int = 4096,
                   allow_jnp_fallback: bool = True,
                   jnp_fallback_elems: int = 32768) -> jax.Array:
    """degrees: [N, 1]; weight: [1, E] (transposed PyTorch weight); bias: [E]
    -> [N, E] = relu(degrees @ weight + bias)."""
    n, one = degrees.shape
    assert one == 1
    e = weight.shape[1]
    assert weight.shape == (1, e) and bias.shape == (e,)

    degrees = degrees.astype(jnp.float32)
    weight = weight.astype(jnp.float32)
    bias = bias.astype(jnp.float32)
    out_dtype = jnp.float32 if out_dtype is None else jnp.dtype(out_dtype)

    # Tiny inputs: fixed Pallas launch/pipeline overhead dominates; let XLA's
    # fused broadcast+relu handle it.
    if allow_jnp_fallback and n * e <= jnp_fallback_elems:
        return jnp.maximum(degrees @ weight + bias[None, :], 0.0).astype(out_dtype)

    # Lane packing factor: fold `pack` logical rows into one lane-dense row.
    g = math.gcd(e, 128)
    pack = 128 // g
    lane = pack * e                          # = lcm(E, 128) when pack > 1
    if pack > 1 and lane > max_packed_lane:
        pack, lane = 1, e                    # awkwardly large E: unpacked path

    n_pad = _round_up(n, pack)
    if n_pad != n:
        # TODO(synk): ragged N forces a pad + post-kernel [:n] slice copy
        # (~2 extra HBM passes); callers should prefer N % pack == 0.
        degrees = jnp.pad(degrees, ((0, n_pad - n), (0, 0)))
    packed_n = n_pad // pack
    deg_packed = degrees.reshape(packed_n, pack)    # row-major identity reshape

    if pack == 1:
        w_in = weight                                # (1, E)
        b_in = bias.reshape(1, e)
    else:
        # Block-diagonal weight: w_in[j, j*E:(j+1)*E] = weight[0, :]
        eye = jnp.eye(pack, dtype=jnp.float32)
        w_in = (eye[:, :, None] * weight[0][None, None, :]).reshape(pack, lane)
        b_in = jnp.tile(bias, (pack,)).reshape(1, lane)

    # Double-buffered VMEM bytes per packed row: the output block plus the
    # degrees block (whose narrow last dim is lane-padded to 128 in VMEM).
    out_itemsize = jnp.dtype(out_dtype).itemsize
    per_row_bytes = 2 * lane * out_itemsize + 2 * 128 * 4
    row_tile = _pick_row_tile(packed_n, per_row_bytes,
                              row_tile_target=row_tile_target,
                              vmem_budget_bytes=vmem_budget_bytes)
    grid = (pl.cdiv(packed_n, row_tile),)            # partial last block is OK

    kernel = functools.partial(_degree_encoder_kernel, packed=pack > 1)

    # HBM-write-bound: ~out_itemsize*N*E written + 4*N read (+ tiny weights).
    bytes_accessed = out_itemsize * packed_n * lane + 4 * n_pad + 4 * (pack + 1) * lane

    out_packed = pl.pallas_call(
        kernel,
        out_shape=jax.ShapeDtypeStruct((packed_n, lane), out_dtype),
        grid_spec=pl.GridSpec(
            grid=grid,
            in_specs=[
                pl.BlockSpec((row_tile, pack), lambda i: (i, 0)),   # degrees
                pl.BlockSpec((pack, lane), lambda i: (0, 0)),       # weight (resident)
                pl.BlockSpec((1, lane), lambda i: (0, 0)),          # bias (resident)
            ],
            out_specs=pl.BlockSpec((row_tile, lane), lambda i: (i, 0)),
        ),
        compiler_params=pltpu.CompilerParams(
            dimension_semantics=("parallel",)),
        cost_estimate=pl.CostEstimate(
            flops=2 * n_pad * e,
            transcendentals=0,
            bytes_accessed=bytes_accessed),
    )(deg_packed, w_in, b_in)

    # (packed_n, pack*E) row-major is bit-identical to (n_pad, E) row-major.
    out = out_packed.reshape(n_pad, e)
    if n_pad != n:
        out = out[:n]                                 # ragged-N case only
    return out


def _reference(degrees, weight, bias):
    return jnp.maximum(degrees @ weight + bias[None, :], 0.0)


def _make_inputs(key, n, e):
    k_deg, k_w, k_b = jax.random.split(key, 3)
    degrees = jax.random.randint(k_deg, (n, 1), 0, 10).astype(jnp.float32)
    bound = 1.0  # PyTorch Linear(1, E): U(-1/sqrt(fan_in), 1/sqrt(fan_in)), fan_in = 1
    weight = jax.random.uniform(k_w, (1, e), jnp.float32, -bound, bound)
    bias = jax.random.uniform(k_b, (e,), jnp.float32, -bound, bound)
    return degrees, weight, bias


if __name__ == "__main__":
    key = jax.random.PRNGKey(0)

    # (n, expand_dim, out_dtype, allow_jnp_fallback, atol, rtol)
    cases = [
        (8,    32, jnp.float32,  False, 1e-5, 1e-5),  # tiny, forced Pallas path
        (4099, 32, jnp.float32,  False, 1e-5, 1e-5),  # packed path, ragged N, partial tiles
        (640, 128, jnp.float32,  False, 1e-5, 1e-5),  # E % 128 == 0 -> VPU broadcast path
        (4096, 32, jnp.bfloat16, False, 3e-2, 3e-2),  # bf16 output halves the write stream
        (8,    32, jnp.float32,  True,  1e-5, 1e-5),  # tiny-input jnp fallback path
    ]
    for idx, (n, e, odt, fb, atol, rtol) in enumerate(cases):
        degrees, weight, bias = _make_inputs(jax.random.fold_in(key, idx), n, e)
        out = degree_encoder(degrees, weight, bias, out_dtype=odt,
                             allow_jnp_fallback=fb)
        out = jax.block_until_ready(out)
        ref = _reference(degrees, weight, bias)
        assert out.shape == (n, e), (out.shape, n, e)
        assert out.dtype == jnp.dtype(odt)
        assert jnp.allclose(out.astype(jnp.float32), ref, atol=atol, rtol=rtol), (n, e)

    print("KERNEL_OK")
</pallas_src>

<mosaic_0001>
module attributes {stable_mosaic.version = 11 : i64} {
  func.func @_degree_encoder_kernel(%arg0: i32, %arg1: memref<2x4xf32, #tpu.memory_space<vmem>>, %arg2: memref<4x128xf32, #tpu.memory_space<vmem>>, %arg3: memref<1x128xf32, #tpu.memory_space<vmem>>, %arg4: memref<2x128xf32, #tpu.memory_space<vmem>>) attributes {dimension_semantics = [#tpu.dimension_semantics<parallel>], iteration_bounds = array<i64: 1>, scalar_prefetch = 0 : i64, scratch_operands = 0 : i64, tpu.core_type = #tpu.core_type<tc>, window_params = [{transform_indices = @transform_0, window_bounds = array<i64: 2, 4>}, {pipeline_mode = #tpu.pipeline_mode<synchronous>, transform_indices = @transform_1, window_bounds = array<i64: 4, 128>}, {pipeline_mode = #tpu.pipeline_mode<synchronous>, transform_indices = @transform_2, window_bounds = array<i64: 1, 128>}, {transform_indices = @transform_3, window_bounds = array<i64: 2, 128>}]} {
    %c0 = arith.constant 0 : index
    %c0_0 = arith.constant 0 : index
    %0 = vector.load %arg2[%c0, %c0_0] : memref<4x128xf32, #tpu.memory_space<vmem>>, vector<4x128xf32>
    %c0_1 = arith.constant 0 : index
    %c0_2 = arith.constant 0 : index
    %1 = vector.load %arg3[%c0_1, %c0_2] : memref<1x128xf32, #tpu.memory_space<vmem>>, vector<1x128xf32>
    %c0_3 = arith.constant 0 : index
    %c0_4 = arith.constant 0 : index
    %2 = vector.load %arg1[%c0_3, %c0_4] : memref<2x4xf32, #tpu.memory_space<vmem>>, vector<2x4xf32>
    %cst = arith.constant dense<0.000000e+00> : vector<2x128xf32>
    %3 = tpu.matmul %2, %0, %cst {dimension_numbers = #tpu.dot_dimension_numbers<[1], [0], [0], [1], [0, 0, 1, 1], [], []>} : vector<2x4xf32>, vector<4x128xf32>, vector<2x128xf32> -> vector<2x128xf32>
    %4 = vector.broadcast %1 : vector<1x128xf32> to vector<2x128xf32>
    %5 = arith.addf %3, %4 : vector<2x128xf32>
    %cst_5 = arith.constant 0.000000e+00 : f32
    %6 = vector.broadcast %cst_5 : f32 to vector<2x128xf32>
    %7 = arith.maximumf %5, %6 : vector<2x128xf32>
    %c0_6 = arith.constant 0 : index
    %c0_7 = arith.constant 0 : index
    %8 = vector.load %arg4[%c0_6, %c0_7] : memref<2x128xf32, #tpu.memory_space<vmem>>, vector<2x128xf32>
    tpu.vector_store %arg4[%c0_6, %c0_7], %7 {strides = array<i32>} : memref<2x128xf32, #tpu.memory_space<vmem>>, vector<2x128xf32>,
    return
  }
  func.func @transform_0(%arg0: i32) -> (i32, i32) {
    %c0_i32 = arith.constant 0 : i32
    %c0_i32_0 = arith.constant 0 : i32
    return %arg0, %c0_i32 : i32, i32
  }
  func.func @transform_1(%arg0: i32) -> (i32, i32) {
    %c0_i32 = arith.constant 0 : i32
    %c0_i32_0 = arith.constant 0 : i32
    %c0_i32_1 = arith.constant 0 : i32
    return %c0_i32, %c0_i32_0 : i32, i32
  }
  func.func @transform_2(%arg0: i32) -> (i32, i32) {
    %c0_i32 = arith.constant 0 : i32
    %c0_i32_0 = arith.constant 0 : i32
    %c0_i32_1 = arith.constant 0 : i32
    return %c0_i32, %c0_i32_0 : i32, i32
  }
  func.func @transform_3(%arg0: i32) -> (i32, i32) {
    %c0_i32 = arith.constant 0 : i32
    %c0_i32_0 = arith.constant 0 : i32
    return %arg0, %c0_i32 : i32, i32
  }
}

</mosaic_0001>

<llo_original>
// kernel: tpu_custom_call.1
$region0: #{tpu_custom_call.1}
  #allocation0 [shape = 'u32[]', space=smem, size = 0x4, offset = 0x4, fixed_abs, tag = 'smem constant byte address 0x4 - core index']
  #allocation1 [shape = 'u32[144,128]{1,0:T(1,128)}', space=vmem, size = 0x12000, scoped, tag = 'internal scratch']
  %s0 = inlined_call_operand.hbm [shape: f32[2,4], index: 0, kind: input, shape index: {}]
  %s1 = inlined_call_operand.hbm [shape: f32[4,128], index: 1, kind: input, shape index: {}]
  %s2 = inlined_call_operand.vmem [shape: f32[1,128], index: 2, kind: input, shape index: {}]
  %s3 = inlined_call_operand.hbm [shape: f32[2,128], index: 3, kind: output, shape index: {}]
  %s4 = sld [smem:[#allocation0]]
  $region30: #{tpu_custom_call.1} parent=0
    _
  %s6 = ssub.s32 1, %s4
  %s7 = scalar_select 0, %s6, %s4
  $region1: #{tpu_custom_call.1} parent=0
    #allocation2 [shape = 'u8[1024]{0}', space=vmem, size = 0x400, scoped, tag = 'input window, operand 0, single buffered']
    #allocation3 [shape = 's32[1]{0}', space=sflag, size = 0x4, scoped, tag = 'scoped memory for tpu_custom_call.1']
    #allocation4 [shape = 's32[1]{0}', space=sflag, size = 0x4, scoped, tag = 'scoped memory for tpu_custom_call.1']
    #allocation5 [shape = 'u8[2048]{0}', space=vmem, size = 0x800, scoped, tag = 'input window, operand 1, single buffered']
    #allocation6 [shape = 's32[1]{0}', space=sflag, size = 0x4, scoped, tag = 'scoped memory for tpu_custom_call.1']
    #allocation7 [shape = 'u8[1024]{0}', space=vmem, size = 0x400, scoped, tag = 'output window, operand 0, single buffered']
    %8 = vsyncpa [#allocation3], 0
    %9 = vsyncpa [#allocation6], 0
    %10 = vsyncpa [#allocation4], 0
    // Predicated region
    $region2: #{tpu_custom_call.1} parent=1 // pred_check
      _
    $region3: #{tpu_custom_call.1} parent=1 // pred_check_branch
      %12 = sbr.rel (0) target = $region5
    $region4: #{tpu_custom_call.1} parent=1 // pred_region
      %s14 = ssub.s32 32, 32
      %15 = vsyncadd [#allocation3], %s14
      %s17 = sshll.u32 [#allocation2], 4
      %s18 = int_to_ptr.vmem [resolvable:$true] %s17
      %20 = dma.hbm_to_vmem [thread:$0]  %s0, 32, %s18, [#allocation3]
    $region5: #{tpu_custom_call.1} parent=1 // pred_fallthru
      _
    // Predicated region
    $region6: #{tpu_custom_call.1} parent=1 // pred_check
      _
    $region7: #{tpu_custom_call.1} parent=1 // pred_check_branch
      %22 = sbr.rel (0) target = $region9
    $region8: #{tpu_custom_call.1} parent=1 // pred_region
      %s24 = ssub.s32 64, 64
      %25 = vsyncadd [#allocation6], %s24
      %s27 = sshll.u32 [#allocation5], 4
      %s28 = int_to_ptr.vmem [resolvable:$true] %s27
      %30 = dma.hbm_to_vmem [thread:$0]  %s1, 64, %s28, [#allocation6]
    $region9: #{tpu_custom_call.1} parent=1 // pred_fallthru
      _
    // Predicated region
    $region10: #{tpu_custom_call.1} parent=1 // pred_check
      _
    $region11: #{tpu_custom_call.1} parent=1 // pred_check_branch
      %32 = sbr.rel (0) target = $region13
    $region12: #{tpu_custom_call.1} parent=1 // pred_region
      _
    $region13: #{tpu_custom_call.1} parent=1 // pred_fallthru
      _
    // Predicated region
    $region14: #{tpu_custom_call.1} parent=1 // pred_check
      _
    $region15: #{tpu_custom_call.1} parent=1 // pred_check_branch
      %34 = sbr.rel (0) target = $region17
    $region16: #{tpu_custom_call.1} parent=1 // pred_region
      %35 = dma.done [#allocation3], 32
    $region17: #{tpu_custom_call.1} parent=1 // pred_fallthru
      _
    // Predicated region
    $region18: #{tpu_custom_call.1} parent=1 // pred_check
      _
    $region19: #{tpu_custom_call.1} parent=1 // pred_check_branch
      %37 = sbr.rel (0) target = $region21
    $region20: #{tpu_custom_call.1} parent=1 // pred_region
      %38 = dma.done [#allocation6], 64
    $region21: #{tpu_custom_call.1} parent=1 // pred_fallthru
      _
    %v39 = vld [vmem:[#allocation5] sm:$0xf]
    %v40 = vld [vmem:[%s2] sm:$0x1]
    %v41 = vld [vmem:[#allocation2] sm:$0x3]
    %v43 = vlaneseq
    %v44 = vshrl.u32 %v43, 7
    %v45 = vsub.s32 0, %v44
    %v46 = vrot.slane %v40, %v45
    %vm48 = vcmask 31744
    %v50 = vsel %vm48, %v41, 0
    %vm52 = vcmask 1043456
    %v54 = vsel %vm52, %v39, 0
    %56 = vmatprep.subr.mxu0 0.0
    %57 = vmatpush1.msra.mxu0 %v54
    %58 = vmatprep.subr.mxu0 0.0
    %59 = vmatpush1.msra.mxu0 0.0
    %60 = vmatprep.subr.mxu0 0.0
    %61 = vmatpush1.msra.mxu0 0.0
    %62 = vmatprep.subr.mxu0 0.0
    %63 = vmatpush1.msra.mxu0 0.0
    %64 = vmatprep.subr.mxu0 0.0
    %65 = vmatpush1.msra.mxu0 0.0
    %66 = vmatprep.subr.mxu0 0.0
    %67 = vmatpush1.msra.mxu0 0.0
    %68 = vmatprep.subr.mxu0 0.0
    %69 = vmatpush1.msra.mxu0 0.0
    %70 = vmatprep.subr.mxu0 0.0
    %71 = vmatpush1.msra.mxu0 0.0
    %72 = vmatprep.subr.mxu0 0.0
    %73 = vmatpush1.msra.mxu0 0.0
    %74 = vmatprep.subr.mxu0 0.0
    %75 = vmatpush1.msra.mxu0 0.0
    %76 = vmatprep.subr.mxu0 0.0
    %77 = vmatpush1.msra.mxu0 0.0
    %78 = vmatprep.subr.mxu0 0.0
    %79 = vmatpush1.msra.mxu0 0.0
    %80 = vmatprep.subr.mxu0 0.0
    %81 = vmatpush1.msra.mxu0 0.0
    %82 = vmatprep.subr.mxu0 0.0
    %83 = vmatpush1.msra.mxu0 0.0
    %84 = vmatprep.subr.mxu0 0.0
    %85 = vmatpush1.msra.mxu0 0.0
    %86 = vmatprep.subr.mxu0 0.0
    %87 = vmatpush1.msra.mxu0 0.0
    %88 = vmatprep.subr.mxu0 0.0
    %89 = vmatpush1.msra.mxu0 0.0
    %90 = vmatprep.subr.mxu0 0.0
    %91 = vmatpush1.msra.mxu0 0.0
    %92 = vmatprep.subr.mxu0 0.0
    %93 = vmatpush1.msra.mxu0 0.0
    %94 = vmatprep.subr.mxu0 0.0
    %95 = vmatpush1.msra.mxu0 0.0
    %96 = vmatprep.subr.mxu0 0.0
    %97 = vmatpush1.msra.mxu0 0.0
    %98 = vmatprep.subr.mxu0 0.0
    %99 = vmatpush1.msra.mxu0 0.0
    %100 = vmatprep.subr.mxu0 0.0
    %101 = vmatpush1.msra.mxu0 0.0
    %102 = vmatprep.subr.mxu0 0.0
    %103 = vmatpush1.msra.mxu0 0.0
    %104 = vmatprep.subr.mxu0 0.0
    %105 = vmatpush1.msra.mxu0 0.0
    %106 = vmatprep.subr.mxu0 0.0
    %107 = vmatpush1.msra.mxu0 0.0
    %108 = vmatprep.subr.mxu0 0.0
    %109 = vmatpush1.msra.mxu0 0.0
    %110 = vmatprep.subr.mxu0 0.0
    %111 = vmatpush1.msra.mxu0 0.0
    %112 = vmatprep.subr.mxu0 0.0
    %113 = vmatpush1.msra.mxu0 0.0
    %114 = vmatprep.subr.mxu0 0.0
    %115 = vmatpush1.msra.mxu0 0.0
    %116 = vmatprep.subr.mxu0 0.0
    %117 = vmatpush1.msra.mxu0 0.0
    %118 = vmatprep.subr.mxu0 0.0
    %119 = vmatpush1.msra.mxu0 0.0
    %120 = vmatprep.mubr.f32.mxu0 0.0
    %121 = vmatmul.mubr.f32.gmra.mrb[0].mxu0 %v50
    %v122 = vpop.f32.mrb[0].mxu0
    %v123 = vadd.f32 %v46, %v122
    %v124 = vpop.f32.mrb[0].mxu0
    %125 = vdwg.mxu0
    %v126 = vmax.f32 %v123, 0.0
    %127 = vst [vmem:[#allocation7] sm:$0x3] %v126
    // Predicated region
    $region22: #{tpu_custom_call.1} parent=1 // pred_check
      _
    $region23: #{tpu_custom_call.1} parent=1 // pred_check_branch
      %129 = sbr.rel (0) target = $region25
    $region24: #{tpu_custom_call.1} parent=1 // pred_region
      %s131 = ssub.s32 32, 32
      %132 = vsyncadd [#allocation4], %s131
      %s134 = sshll.u32 [#allocation7], 4
      %s135 = int_to_ptr.vmem [resolvable:$true] %s134
      %137 = dma.vmem_to_hbm [thread:$0]  %s135, 32, %s3, [#allocation4]
    $region25: #{tpu_custom_call.1} parent=1 // pred_fallthru
      _
    // Predicated region
    $region26: #{tpu_custom_call.1} parent=1 // pred_check
      _
    $region27: #{tpu_custom_call.1} parent=1 // pred_check_branch
      %139 = sbr.rel (0) target = $region29
    $region28: #{tpu_custom_call.1} parent=1 // pred_region
      %140 = dma.done [#allocation4], 32
    $region29: #{tpu_custom_call.1} parent=1 // pred_fallthru
      _
    %141 = vsyncpa [#allocation3], 1
    %142 = vsyncpa [#allocation6], 1
    %143 = vsyncpa [#allocation4], 1

</llo_original>
